<compile_context>
chip_gen: v6e
topology: v6e:2x2x1
jax: 0.10.0
libtpu: 0.0.40
codegen_flags: <defaults>
</compile_context>

<pallas_src>
import jax
import jax.numpy as jnp
from jax.experimental import pallas as pl
from jax.experimental.pallas import tpu as pltpu


NH = 16  # fused head width: 3 cls + 12 reg + 1 zero pad


# ----------------------------------------------------------------------------
# Backbone: synthetic 1x1 conv (Cin -> 256) + ReLU, as a Pallas matmul on a
# pre-flattened (N, H*W, Cin) slab (no in-kernel NHWC reshapes).
# ----------------------------------------------------------------------------
def _backbone_kernel(x_ref, w_ref, b_ref, o_ref):
    y = jnp.dot(x_ref[0], w_ref[...], preferred_element_type=jnp.float32)
    o_ref[0] = jnp.maximum(y + b_ref[0, :], 0.0)


def backbone_conv1x1(x_flat, w, b):
    """x_flat: (N, H*W, Cin) f32 -> (N, H*W, Cout) f32."""
    N, HW, Cin = x_flat.shape
    Cout = w.shape[1]
    return pl.pallas_call(
        _backbone_kernel,
        out_shape=jax.ShapeDtypeStruct((N, HW, Cout), jnp.float32),
        grid_spec=pltpu.PrefetchScalarGridSpec(
            num_scalar_prefetch=0,
            grid=(N,),
            in_specs=[
                pl.BlockSpec((1, HW, Cin), lambda n: (n, 0, 0)),
                pl.BlockSpec((Cin, Cout), lambda n: (0, 0)),
                pl.BlockSpec((1, Cout), lambda n: (0, 0)),
            ],
            out_specs=pl.BlockSpec((1, HW, Cout), lambda n: (n, 0, 0)),
        ),
        compiler_params=pltpu.CompilerParams(
            dimension_semantics=("parallel",)),
    )(x_flat, w, b)


# ----------------------------------------------------------------------------
# RPN: fused conv3x3(pad=1) + ReLU + fused cls/reg 1x1 heads.
# Grid = (batch, row-strips).  Per strip:
#   - 9 MXU matmuls on contiguous pl.ds row windows of the flattened padded slab,
#     accumulated into a small f32 VMEM scratch,
#   - bias + ReLU, fused (C, 16) head matmul,
#   - junk-column drop + transpose on the tiny head tensor,
#   - one lane-dense (16, TH*W) store.
# ----------------------------------------------------------------------------
def _make_rpn_kernel(H, W, C, TH):
    Wp = W + 2
    RPAD = TH * Wp          # rows per strip in the padded-pitch domain (incl. junk cols)

    def kernel(x_ref, w3_ref, b3_ref, wh_ref, bh_ref, o_ref, acc_ref):
        s = pl.program_id(1)
        base = s * RPAD                      # first padded row needed by this strip

        # 3x3 conv as 9 shifted MXU matmuls (bf16 in, f32 accumulate in VMEM scratch).
        for dh in range(3):
            for dw in range(3):
                off = base + dh * Wp + dw
                xs = x_ref[0, pl.ds(off, RPAD), :].astype(jnp.bfloat16)
                part = jnp.dot(xs, w3_ref[dh, dw],
                               preferred_element_type=jnp.float32)
                if dh == 0 and dw == 0:
                    acc_ref[...] = part      # first tap overwrites (no zero-fill pass)
                else:
                    acc_ref[...] += part

        # bias + ReLU (hoisted out of the tap loop), then fused cls/reg heads.
        xact = jnp.maximum(acc_ref[...] + b3_ref[0, :], 0.0)
        heads = jnp.dot(xact.astype(jnp.bfloat16), wh_ref[...],
                        preferred_element_type=jnp.float32)       # (RPAD, 16)
        heads = heads + bh_ref[0, :]

        # Drop the junk columns (w >= W) once, on the small head tensor, then transpose
        # so H*W sits on the 128-lane axis of the output store (lane-dense vst).
        heads = heads.reshape(TH, Wp, NH)[:, :W, :].reshape(TH * W, NH)
        o_ref[0] = jnp.transpose(heads, (1, 0))                   # (16, TH*W)

    return kernel


def rpn_level(feature, w3_bf16, b3, wh_bf16, bh):
    """feature: (N, H, W, C) f32 -> fused heads (N, 16, H*W) f32 (row-major h*W+w)."""
    N, H, W, C = feature.shape
    Wp = W + 2
    TH = min(H, max(1, 128 // W))            # rows per strip -> TH*W lanes per store
    assert H % TH == 0, (H, TH)
    S = H // TH
    TW = TH * W
    RPAD = TH * Wp

    # 1-pixel halo pad + 2 spare tail rows so every shifted strip window stays in-bounds,
    # flattened so conv taps become contiguous row slices.  (Cheap at these sizes; at
    # production scale this pad/flatten would be fused into the backbone's output write.)
    xpad = jnp.pad(feature, ((0, 0), (1, 3), (1, 1), (0, 0)))     # (N, H+4, W+2, C)
    L = (H + 4) * Wp
    x_flat = xpad.reshape(N, L, C)

    kernel = _make_rpn_kernel(H, W, C, TH)
    return pl.pallas_call(
        kernel,
        out_shape=jax.ShapeDtypeStruct((N, NH, H * W), jnp.float32),
        grid_spec=pltpu.PrefetchScalarGridSpec(
            num_scalar_prefetch=0,
            grid=(N, S),
            in_specs=[
                # whole padded level, resident per batch (constant along the strip axis)
                pl.BlockSpec((1, L, C), lambda n, s: (n, 0, 0)),
                pl.BlockSpec((3, 3, C, C), lambda n, s: (0, 0, 0, 0)),
                pl.BlockSpec((1, C), lambda n, s: (0, 0)),
                pl.BlockSpec((C, NH), lambda n, s: (0, 0)),
                pl.BlockSpec((1, NH), lambda n, s: (0, 0)),
            ],
            out_specs=pl.BlockSpec((1, NH, TW), lambda n, s: (n, 0, s)),
            scratch_shapes=[pltpu.VMEM((RPAD, C), jnp.float32)],
        ),
        compiler_params=pltpu.CompilerParams(
            dimension_semantics=("parallel", "parallel")),
    )(x_flat, w3_bf16, b3, wh_bf16, bh)


# ----------------------------------------------------------------------------
# Parameters (deterministic, synthetic).
# ----------------------------------------------------------------------------
def init_params(key, cin=4, c=256, n_anchors=3):
    ks = jax.random.split(key, 8)
    s = 0.02
    return {
        # synthetic backbone (constructor argument in the PyTorch module)
        "wb": jax.random.normal(ks[0], (cin, c), jnp.float32) * s,
        "bb": jax.random.normal(ks[1], (1, c), jnp.float32) * s,
        # RPN.conv3 : 3x3, 256 -> 256   (stored as (kh, kw, Cin, Cout))
        "w3": jax.random.normal(ks[2], (3, 3, c, c), jnp.float32) * s,
        "b3": jax.random.normal(ks[3], (1, c), jnp.float32) * s,
        # RPN.cls : 1x1, 256 -> 3
        "wc": jax.random.normal(ks[4], (c, n_anchors), jnp.float32) * s,
        "bc": jax.random.normal(ks[5], (1, n_anchors), jnp.float32) * s,
        # RPN.reg : 1x1, 256 -> 12
        "wr": jax.random.normal(ks[6], (c, 4 * n_anchors), jnp.float32) * s,
        "br": jax.random.normal(ks[7], (1, 4 * n_anchors), jnp.float32) * s,
    }


# ----------------------------------------------------------------------------
# FasterRCNN.forward
# ----------------------------------------------------------------------------
def faster_rcnn_forward(x_nchw, params):
    N, Cin, H, W = x_nchw.shape
    # PyTorch input is NCHW; kernels work on flat (rows, channels-on-lanes) slabs.
    x_flat = jnp.transpose(x_nchw, (0, 2, 3, 1)).reshape(N, H * W, Cin)

    # Backbone -> two pyramid levels (1x1 conv kernel + 2x2 maxpool glue).
    f0_flat = backbone_conv1x1(x_flat, params["wb"], params["bb"])   # (N, H*W, 256)
    C = f0_flat.shape[-1]
    f0 = f0_flat.reshape(N, H, W, C)
    f1 = f0.reshape(N, H // 2, 2, W // 2, 2, C).max(axis=(2, 4))     # 2x2 maxpool (glue)
    features = [f0, f1]
    feature_dims = [(f.shape[1], f.shape[2]) for f in features]      # (H_i, W_i)

    # Fused head weights: columns [cls(3) | reg(12) | zero pad(1)] -> 16-lane packed.
    wh = jnp.concatenate(
        [params["wc"], params["wr"], jnp.zeros((C, 1), jnp.float32)],
        axis=1).astype(jnp.bfloat16)                                  # (C, 16)
    bh = jnp.concatenate(
        [params["bc"], params["br"], jnp.zeros((1, 1), jnp.float32)], axis=1)  # (1, 16)
    w3 = params["w3"].astype(jnp.bfloat16)

    classes, boxes = [], []
    for f in features:
        heads = rpn_level(f, w3, params["b3"], wh, bh)               # (N, 16, H_i*W_i)
        n, _, hw = heads.shape
        # permute_and_reshape equivalent (kernel output is channel-major, spatially
        # row-major h*W+w, i.e. already NHWC-ordered along the lane axis).
        cls = jnp.transpose(heads[:, 0:3, :], (0, 2, 1)).reshape(n, hw * 3, 1)
        reg = jnp.transpose(heads[:, 3:15, :], (0, 2, 1)).reshape(n, hw * 3, 4)
        classes.append(cls)
        boxes.append(reg)

    cls_out = jnp.concatenate(classes, axis=1)                        # (N, sum HW_i*3, 1)
    box_out = jnp.concatenate(boxes, axis=1)                          # (N, sum HW_i*3, 4)
    return box_out, cls_out, feature_dims

# TODO(synk): FasterRCNN.detect() (sigmoid-threshold + sort + NMS loop) is not part of
# forward(); its data-dependent boolean indexing has no clean static Pallas equivalent.


if __name__ == "__main__":
    key = jax.random.PRNGKey(0)
    pkey, xkey = jax.random.split(key)
    params = init_params(pkey, cin=4, c=256, n_anchors=3)

    # Small NCHW input, as the PyTorch module would receive.
    x = jax.random.normal(xkey, (2, 4, 16, 16), jnp.float32)

    box, cls, feature_dims = faster_rcnn_forward(x, params)
    jax.block_until_ready((box, cls))

    expected_n = 16 * 16 * 3 + 8 * 8 * 3      # two pyramid levels, 3 anchors each
    assert box.shape == (2, expected_n, 4), box.shape
    assert cls.shape == (2, expected_n, 1), cls.shape
    assert feature_dims == [(16, 16), (8, 8)], feature_dims
    assert jnp.all(jnp.isfinite(box)) and jnp.all(jnp.isfinite(cls))

    print("KERNEL_OK")
</pallas_src>

<mosaic_0001>
module attributes {stable_mosaic.version = 11 : i64} {
  func.func @_backbone_kernel(%arg0: i32, %arg1: memref<1x256x4xf32, #tpu.memory_space<vmem>>, %arg2: memref<4x256xf32, #tpu.memory_space<vmem>>, %arg3: memref<1x256xf32, #tpu.memory_space<vmem>>, %arg4: memref<1x256x256xf32, #tpu.memory_space<vmem>>) attributes {dimension_semantics = [#tpu.dimension_semantics<parallel>], iteration_bounds = array<i64: 2>, scalar_prefetch = 0 : i64, scratch_operands = 0 : i64, tpu.core_type = #tpu.core_type<tc>, window_params = [{transform_indices = @transform_0, window_bounds = array<i64: 1, 256, 4>}, {pipeline_mode = #tpu.pipeline_mode<synchronous>, transform_indices = @transform_1, window_bounds = array<i64: 4, 256>}, {pipeline_mode = #tpu.pipeline_mode<synchronous>, transform_indices = @transform_2, window_bounds = array<i64: 1, 256>}, {transform_indices = @transform_3, window_bounds = array<i64: 1, 256, 256>}]} {
    %c0 = arith.constant 0 : index
    %c0_0 = arith.constant 0 : index
    %c0_1 = arith.constant 0 : index
    %0 = vector.load %arg1[%c0, %c0_0, %c0_1] : memref<1x256x4xf32, #tpu.memory_space<vmem>>, vector<1x256x4xf32>
    %1 = vector.shape_cast %0 : vector<1x256x4xf32> to vector<256x4xf32>
    %c0_2 = arith.constant 0 : index
    %c0_3 = arith.constant 0 : index
    %2 = vector.load %arg2[%c0_2, %c0_3] : memref<4x256xf32, #tpu.memory_space<vmem>>, vector<4x256xf32>
    %cst = arith.constant dense<0.000000e+00> : vector<256x256xf32>
    %3 = tpu.matmul %1, %2, %cst {dimension_numbers = #tpu.dot_dimension_numbers<[1], [0], [0], [1], [0, 0, 1, 1], [], []>} : vector<256x4xf32>, vector<4x256xf32>, vector<256x256xf32> -> vector<256x256xf32>
    %c0_4 = arith.constant 0 : index
    %c0_5 = arith.constant 0 : index
    %4 = vector.load %arg3[%c0_4, %c0_5] : memref<1x256xf32, #tpu.memory_space<vmem>>, vector<1x256xf32>
    %5 = vector.shape_cast %4 : vector<1x256xf32> to vector<256xf32>
    %6 = vector.shape_cast %5 : vector<256xf32> to vector<1x256xf32>
    %7 = vector.broadcast %6 : vector<1x256xf32> to vector<256x256xf32>
    %8 = arith.addf %3, %7 : vector<256x256xf32>
    %cst_6 = arith.constant 0.000000e+00 : f32
    %9 = vector.broadcast %cst_6 : f32 to vector<256x256xf32>
    %10 = arith.maximumf %8, %9 : vector<256x256xf32>
    %c0_7 = arith.constant 0 : index
    %c0_8 = arith.constant 0 : index
    %c0_9 = arith.constant 0 : index
    %11 = vector.load %arg4[%c0_7, %c0_8, %c0_9] : memref<1x256x256xf32, #tpu.memory_space<vmem>>, vector<1x256x256xf32>
    %12 = vector.shape_cast %11 : vector<1x256x256xf32> to vector<256x256xf32>
    %13 = vector.shape_cast %10 : vector<256x256xf32> to vector<1x256x256xf32>
    tpu.vector_store %arg4[%c0_7, %c0_8, %c0_9], %13 {strides = array<i32>} : memref<1x256x256xf32, #tpu.memory_space<vmem>>, vector<1x256x256xf32>,
    return
  }
  func.func @transform_0(%arg0: i32) -> (i32, i32, i32) {
    %c0_i32 = arith.constant 0 : i32
    %c0_i32_0 = arith.constant 0 : i32
    %c0_i32_1 = arith.constant 0 : i32
    return %arg0, %c0_i32, %c0_i32_0 : i32, i32, i32
  }
  func.func @transform_1(%arg0: i32) -> (i32, i32) {
    %c0_i32 = arith.constant 0 : i32
    %c0_i32_0 = arith.constant 0 : i32
    %c0_i32_1 = arith.constant 0 : i32
    return %c0_i32, %c0_i32_0 : i32, i32
  }
  func.func @transform_2(%arg0: i32) -> (i32, i32) {
    %c0_i32 = arith.constant 0 : i32
    %c0_i32_0 = arith.constant 0 : i32
    %c0_i32_1 = arith.constant 0 : i32
    return %c0_i32, %c0_i32_0 : i32, i32
  }
  func.func @transform_3(%arg0: i32) -> (i32, i32, i32) {
    %c0_i32 = arith.constant 0 : i32
    %c0_i32_0 = arith.constant 0 : i32
    %c0_i32_1 = arith.constant 0 : i32
    return %arg0, %c0_i32, %c0_i32_0 : i32, i32, i32
  }
}

</mosaic_0001>

<llo_original>
// kernel: tpu_custom_call.1
$region0: #{tpu_custom_call.1}
  #allocation0 [shape = 'u32[]', space=smem, size = 0x4, offset = 0x4, fixed_abs, tag = 'smem constant byte address 0x4 - core index']
  #allocation1 [shape = 'u32[144,128]{1,0:T(1,128)}', space=vmem, size = 0x12000, scoped, tag = 'internal scratch']
  %s0 = inlined_call_operand.vmem [shape: f32[2,256,4], index: 0, kind: input, shape index: {}]
  %s1 = inlined_call_operand.vmem [shape: f32[4,256], index: 1, kind: input, shape index: {}]
  %s2 = inlined_call_operand.vmem [shape: f32[1,256], index: 2, kind: input, shape index: {}]
  %s3 = inlined_call_operand.hbm [shape: f32[2,256,256], index: 3, kind: output, shape index: {}]
  %s4 = sld [smem:[#allocation0]]
  $region45: #{tpu_custom_call.1} parent=0
    _
  %s6 = ssub.s32 1, %s4
  %s7 = scalar_select 0, %s6, %s4
  $region1: #{tpu_custom_call.1} parent=0
    #allocation2 [shape = 'u8[524288]{0}', space=vmem, size = 0x80000, scoped, tag = 'output window, operand 0']
    #allocation3 [shape = 's32[2]{0}', space=sflag, size = 0x8, scoped, tag = 'scoped memory for tpu_custom_call.1']
    %8 = vsyncpa [#allocation3], 0
    %s9 = scalar_lea.sflag [#allocation3], 1
    %10 = vsyncpa %s9, 0
    loop: start=0, step=1, limit=4
    $region2: #{tpu_custom_call.1} parent=1 // loop_pre_header
      _
    $region3: #{tpu_custom_call.1} parent=1 // loop_header
      %s12 = sphi 0, %s16
      %p13 = scmp.ge.s32.totalorder %s12, 4
      %s22 = sphi 0, %s24
      %s25 = sphi 0, %s22
      %s26 = sphi 0, %s25
      %s42 = sphi 0, %s26
      %s46 = sphi 0, %s46
      %s48 = sphi 0, %s46
      %s49 = sphi 0, %s48
      %s63 = sphi 0, %s49
      %s67 = sphi 0, %s67
      %s69 = sphi 0, %s67
      %s70 = sphi 0, %s69
      %s84 = sphi 0, %s70
      %s90 = sphi 0, %s92
      %s93 = sphi 0, %s90
      %s94 = sphi 0, %s93
      %s110 = sphi 0, %s94
    $region4: #{tpu_custom_call.1} parent=1 // loop_header_branch
      %15 = sbr.rel (%p13) target = $region8
    $region5: #{tpu_custom_call.1} parent=1 // loop_body
      %s17 = ssub.s32 %s12, 1
      %s18 = ssub.s32 %s12, 2
      %s19 = sadd.s32 %s12, 1
      %s20 = ssub.s32 %s12, %s19
      %p21 = scmp.eq.s32.totalorder %s20, 0
      %s23 = sadd.s32 %s22, 1
      %s24 = scalar_select %p21, %s22, %s23
      %p27 = pneg %p21
      %p28 = scmp.eq.s32.totalorder %s12, 1
      %p29 = por %p27, %p28
      %p30 = scmp.ne.s32.totalorder %s22, %s25
      %p31 = scmp.eq.s32.totalorder %s12, 0
      %p32 = por %p30, %p31
      %p33 = scmp.ne.s32.totalorder %s22, %s25
      %p34 = scmp.eq.s32.totalorder %s17, 1
      %p35 = por %p33, %p34
      %p36 = scmp.ne.s32.totalorder %s25, %s26
      %p37 = scmp.eq.s32.totalorder %s17, 0
      %p38 = por %p36, %p37
      %p39 = scmp.ne.s32.totalorder %s25, %s26
      %p40 = scmp.eq.s32.totalorder %s18, 1
      %p41 = por %p39, %p40
      %p43 = scmp.ne.s32.totalorder %s26, %s42
      %p44 = scmp.eq.s32.totalorder %s18, 0
      %p45 = por %p43, %p44
      %s47 = sadd.s32 %s46, 1
      %p50 = scmp.eq.s32.totalorder %s12, 1
      %p51 = scmp.ne.s32.totalorder %s46, %s48
      %p52 = scmp.eq.s32.totalorder %s12, 0
      %p53 = por %p51, %p52
      %p54 = scmp.ne.s32.totalorder %s46, %s48
      %p55 = scmp.eq.s32.totalorder %s17, 1
      %p56 = por %p54, %p55
      %p57 = scmp.ne.s32.totalorder %s48, %s49
      %p58 = scmp.eq.s32.totalorder %s17, 0
      %p59 = por %p57, %p58
      %p60 = scmp.ne.s32.totalorder %s48, %s49
      %p61 = scmp.eq.s32.totalorder %s18, 1
      %p62 = por %p60, %p61
      %p64 = scmp.ne.s32.totalorder %s49, %s63
      %p65 = scmp.eq.s32.totalorder %s18, 0
      %p66 = por %p64, %p65
      %s68 = sadd.s32 %s67, 1
      %p71 = scmp.eq.s32.totalorder %s12, 1
      %p72 = scmp.ne.s32.totalorder %s67, %s69
      %p73 = scmp.eq.s32.totalorder %s12, 0
      %p74 = por %p72, %p73
      %p75 = scmp.ne.s32.totalorder %s67, %s69
      %p76 = scmp.eq.s32.totalorder %s17, 1
      %p77 = por %p75, %p76
      %p78 = scmp.ne.s32.totalorder %s69, %s70
      %p79 = scmp.eq.s32.totalorder %s17, 0
      %p80 = por %p78, %p79
      %p81 = scmp.ne.s32.totalorder %s69, %s70
      %p82 = scmp.eq.s32.totalorder %s18, 1
      %p83 = por %p81, %p82
      %p85 = scmp.ne.s32.totalorder %s70, %s84
      %p86 = scmp.eq.s32.totalorder %s18, 0
      %p87 = por %p85, %p86
      %s88 = ssub.s32 %s12, %s19
      %p89 = scmp.eq.s32.totalorder %s88, 0
      %s91 = sadd.s32 %s90, 1
      %s92 = scalar_select %p89, %s90, %s91
      %p95 = pneg %p89
      %p96 = scmp.eq.s32.totalorder %s12, 1
      %p97 = por %p95, %p96
      %p98 = scmp.ne.s32.totalorder %s90, %s93
      %p99 = scmp.eq.s32.totalorder %s12, 0
      %p100 = por %p98, %p99
      %p101 = scmp.ne.s32.totalorder %s90, %s93
      %p102 = scmp.eq.s32.totalorder %s17, 1
      %p103 = por %p101, %p102
      %p104 = scmp.ne.s32.totalorder %s93, %s94
      %p105 = scmp.eq.s32.totalorder %s17, 0
      %p106 = por %p104, %p105
      %p107 = scmp.ne.s32.totalorder %s93, %s94
      %p108 = scmp.eq.s32.totalorder %s18, 1
      %p109 = por %p107, %p108
      %p111 = scmp.ne.s32.totalorder %s94, %s110
      %p112 = scmp.eq.s32.totalorder %s18, 0
      %p113 = por %p111, %p112
      %p114 = scmp.le.s32.totalorder 1, %s12
      %p115 = scmp.lt.s32.totalorder %s12, 3
      %p116 = pnand %p114, %p115
      %p117 = pneg %p116
      // Predicated region
      $region9: #{tpu_custom_call.1} parent=5 // pred_check
        _
      $region10: #{tpu_custom_call.1} parent=5 // pred_check_branch
        %119 = sbr.rel (%p116) target = $region12
      $region11: #{tpu_custom_call.1} parent=5 // pred_region
        %s120 = ssub.s32 %s12, 1
        // Predicated region
        $region13: #{tpu_custom_call.1} parent=11 // pred_check
          %p121 = pneg %p59
        $region14: #{tpu_custom_call.1} parent=11 // pred_check_branch
          %123 = sbr.rel (%p121) target = $region16
        $region15: #{tpu_custom_call.1} parent=11 // pred_region
          _
        $region16: #{tpu_custom_call.1} parent=11 // pred_fallthru
          _
        // Predicated region
        $region17: #{tpu_custom_call.1} parent=11 // pred_check
          %p124 = pneg %p80
        $region18: #{tpu_custom_call.1} parent=11 // pred_check_branch
          %126 = sbr.rel (%p124) target = $region20
        $region19: #{tpu_custom_call.1} parent=11 // pred_region
          _
        $region20: #{tpu_custom_call.1} parent=11 // pred_fallthru
          _
      $region12: #{tpu_custom_call.1} parent=5 // pred_fallthru
        _
      %p127 = scmp.lt.s32.totalorder %s12, 2
      // Predicated region
      $region21: #{tpu_custom_call.1} parent=5 // pred_check
        %p128 = pneg %p127
      $region22: #{tpu_custom_call.1} parent=5 // pred_check_branch
        %130 = sbr.rel (%p128) target = $region24
      $region23: #{tpu_custom_call.1} parent=5 // pred_region
        // Predicated region
        $region25: #{tpu_custom_call.1} parent=23 // pred_check
          %p131 = pneg %p32
        $region26: #{tpu_custom_call.1} parent=23 // pred_check_branch
          %133 = sbr.rel (%p131) target = $region28
        $region27: #{tpu_custom_call.1} parent=23 // pred_region
          %p134 = scmp.lt.s32.totalorder %s12, 1
          %s135 = scalar_select %p134, %s12, 1
          %s136 = smul.addr %s135, 32
          %s137 = smul.addr %s136, 8
          %s138 = scalar_lea.vmem %s0, %s137
        $region28: #{tpu_custom_call.1} parent=23 // pred_fallthru
          _
      $region24: #{tpu_custom_call.1} parent=5 // pred_fallthru
        _
      %p139 = scmp.le.s32.totalorder 1, %s12
      %p140 = scmp.lt.s32.totalorder %s12, 3
      %p141 = pnand %p139, %p140
      %p142 = pneg %p141
      // Predicated region
      $region29: #{tpu_custom_call.1} parent=5 // pred_check
        _
      $region30: #{tpu_custom_call.1} parent=5 // pred_check_branch
        %144 = sbr.rel (%p141) target = $region32
      $region31: #{tpu_custom_call.1} parent=5 // pred_region
        %s145 = ssub.s32 %s12, 1
        %p146 = scmp.lt.s32.totalorder %s17, 1
        %s147 = scalar_select %p146, %s17, 1
        %s148 = smul.addr %s147, 32
        %s149 = smul.addr %s148, 8
        %s150 = scalar_lea.vmem %s0, %s149
        %p151 = pneg %p38
        %p152 = pneg %p35
        %p153 = pneg %p59
        %p154 = pneg %p56
        %p155 = pneg %p80
        %p156 = pneg %p77
        %p157 = pneg %p106
        %p158 = pneg %p103
        %s159 = sand.u32 %s93, 1
        %s160 = scalar_lea.sflag [#allocation3], %s159
        %s161 = sand.u32 %s93, 1
        %s162 = smul.addr %s161, 512
        %s163 = scalar_lea.vmem [#allocation2], %s162
        %p164 = scmp.lt.s32.totalorder %s17, 1
        %s165 = scalar_select %p164, %s17, 1
        %s166 = smul.addr %s165, 32
        %s167 = smul.addr %s166, 8
        %s168 = scalar_lea.vmem %s0, %s167
        %v169 = vld [vmem:[%s168] sm:$0xff]
        %v170 = vld [vmem:[%s168 + $0x8] sm:$0xff]
        %v171 = vld [vmem:[%s168 + $0x10] sm:$0xff]
        %v172 = vld [vmem:[%s168 + $0x18] sm:$0xff]
        %v173 = vld [vmem:[%s168 + $0x20] sm:$0xff]
        %v174 = vld [vmem:[%s168 + $0x28] sm:$0xff]
        %v175 = vld [vmem:[%s168 + $0x30] sm:$0xff]
        %v176 = vld [vmem:[%s168 + $0x38] sm:$0xff]
        %v177 = vld [vmem:[%s168 + $0x40] sm:$0xff]
        %v178 = vld [vmem:[%s168 + $0x48] sm:$0xff]
        %v179 = vld [vmem:[%s168 + $0x50] sm:$0xff]
        %v180 = vld [vmem:[%s168 + $0x58] sm:$0xff]
        %v181 = vld [vmem:[%s168 + $0x60] sm:$0xff]
        %v182 = vld [vmem:[%s168 + $0x68] sm:$0xff]
        %v183 = vld [vmem:[%s168 + $0x70] sm:$0xff]
        %v184 = vld [vmem:[%s168 + $0x78] sm:$0xff]
        %v185 = vld [vmem:[%s168 + $0x80] sm:$0xff]
        %v186 = vld [vmem:[%s168 + $0x88] sm:$0xff]
        %v187 = vld [vmem:[%s168 + $0x90] sm:$0xff]
        %v188 = vld [vmem:[%s168 + $0x98] sm:$0xff]
        %v189 = vld [vmem:[%s168 + $0xa0] sm:$0xff]
        %v190 = vld [vmem:[%s168 + $0xa8] sm:$0xff]
        %v191 = vld [vmem:[%s168 + $0xb0] sm:$0xff]
        %v192 = vld [vmem:[%s168 + $0xb8] sm:$0xff]
        %v193 = vld [vmem:[%s168 + $0xc0] sm:$0xff]
        %v194 = vld [vmem:[%s168 + $0xc8] sm:$0xff]
        %v195 = vld [vmem:[%s168 + $0xd0] sm:$0xff]
        %v196 = vld [vmem:[%s168 + $0xd8] sm:$0xff]
        %v197 = vld [vmem:[%s168 + $0xe0] sm:$0xff]
        %v198 = vld [vmem:[%s168 + $0xe8] sm:$0xff]
        %v199 = vld [vmem:[%s168 + $0xf0] sm:$0xff]
        %v200 = vld [vmem:[%s168 + $0xf8] sm:$0xff]
        %v201 = vld [vmem:[%s1] sm:$0xff]
        %v202 = vld [vmem:[%s2] sm:$0x3]
        %v204 = vlaneseq
        %v205 = vshrl.u32 %v204, 7
        %v206 = vsub.s32 0, %v205
        %v207 = vrot.slane %v202, %v206
        %v208 = vlaneseq
        %v209 = vshrl.u32 %v208, 7
        %v210 = vsub.s32 1, %v209
        %v211 = vrot.slane %v202, %v210
        %v215 = vcombine.high %v201, %v201
        %vm216 = vcmask 31744
        %v218 = vsel %vm216, %v169, 0
        %v221 = vsel %vm216, %v170, 0
        %v224 = vsel %vm216, %v171, 0
        %v227 = vsel %vm216, %v172, 0
        %v230 = vsel %vm216, %v173, 0
        %v233 = vsel %vm216, %v174, 0
        %v236 = vsel %vm216, %v175, 0
        %v239 = vsel %vm216, %v176, 0
        %v242 = vsel %vm216, %v177, 0
        %v245 = vsel %vm216, %v178, 0
        %v248 = vsel %vm216, %v179, 0
        %v251 = vsel %vm216, %v180, 0
        %v254 = vsel %vm216, %v181, 0
        %v257 = vsel %vm216, %v182, 0
        %v260 = vsel %vm216, %v183, 0
        %v263 = vsel %vm216, %v184, 0
        %v266 = vsel %vm216, %v185, 0
        %v269 = vsel %vm216, %v186, 0
        %v272 = vsel %vm216, %v187, 0
        %v275 = vsel %vm216, %v188, 0
        %v278 = vsel %vm216, %v189, 0
        %v281 = vsel %vm216, %v190, 0
        %v284 = vsel %vm216, %v191, 0
        %v287 = vsel %vm216, %v192, 0
        %v290 = vsel %vm216, %v193, 0
        %v293 = vsel %vm216, %v194, 0
        %v296 = vsel %vm216, %v195, 0
        %v299 = vsel %vm216, %v196, 0
        %v302 = vsel %vm216, %v197, 0
        %v305 = vsel %vm216, %v198, 0
        %v308 = vsel %vm216, %v199, 0
        %v311 = vsel %vm216, %v200, 0
        %vm313 = vcmask 1043456
        %v314 = vsel %vm313, %v201, 0
        %v316 = vsel %vm313, %v215, 0
        %318 = vmatprep.subr.mxu0 0.0
        %319 = vmatpush1.msra.mxu0 0.0
        %320 = vmatprep.subr.mxu0 0.0
        %321 = vmatpush1.msra.mxu0 0.0
        %322 = vmatprep.subr.mxu0 0.0
        %323 = vmatpush1.msra.mxu0 0.0
        %324 = vmatprep.subr.mxu0 0.0
        %325 = vmatpush1.msra.mxu0 0.0
        %326 = vmatprep.subr.mxu0 0.0
        %327 = vmatpush1.msra.mxu0 0.0
        %328 = vmatprep.subr.mxu0 0.0
        %329 = vmatpush1.msra.mxu0 0.0
        %330 = vmatprep.subr.mxu0 0.0
        %331 = vmatpush1.msra.mxu0 0.0
        %332 = vmatprep.subr.mxu0 0.0
        %333 = vmatpush1.msra.mxu0 0.0
        %334 = vmatprep.subr.mxu0 0.0
        %335 = vmatpush1.msra.mxu0 0.0
        %336 = vmatprep.subr.mxu0 0.0
        %337 = vmatpush1.msra.mxu0 0.0
        %338 = vmatprep.subr.mxu0 0.0
        %339 = vmatpush1.msra.mxu0 0.0
        %340 = vmatprep.subr.mxu0 0.0
        %341 = vmatpush1.msra.mxu0 0.0
        %342 = vmatprep.subr.mxu0 0.0
        %343 = vmatpush1.msra.mxu0 0.0
        %344 = vmatprep.subr.mxu0 0.0
        %345 = vmatpush1.msra.mxu0 0.0
        %346 = vmatprep.subr.mxu0 0.0
        %347 = vmatpush1.msra.mxu0 0.0
        %348 = vmatprep.subr.mxu0 %v316
        %349 = vmatpush1.msra.mxu0 %v314
        %350 = vmatprep.subr.mxu0 0.0
        %351 = vmatpush2.msra.mxu0 0.0
        %352 = vmatprep.subr.mxu0 0.0
        %353 = vmatpush2.msra.mxu0 0.0
        %354 = vmatprep.subr.mxu0 0.0
        %355 = vmatpush2.msra.mxu0 0.0
        %356 = vmatprep.subr.mxu0 0.0
        %357 = vmatpush2.msra.mxu0 0.0
        %358 = vmatprep.subr.mxu0 0.0
        %359 = vmatpush2.msra.mxu0 0.0
        %360 = vmatprep.subr.mxu0 0.0
        %361 = vmatpush2.msra.mxu0 0.0
        %362 = vmatprep.subr.mxu0 0.0
        %363 = vmatpush2.msra.mxu0 0.0
        %364 = vmatprep.subr.mxu0 0.0
        %365 = vmatpush2.msra.mxu0 0.0
        %366 = vmatprep.subr.mxu0 0.0
        %367 = vmatpush2.msra.mxu0 0.0
        %368 = vmatprep.subr.mxu0 0.0
        %369 = vmatpush2.msra.mxu0 0.0
        %370 = vmatprep.subr.mxu0 0.0
        %371 = vmatpush2.msra.mxu0 0.0
        %372 = vmatprep.subr.mxu0 0.0
        %373 = vmatpush2.msra.mxu0 0.0
        %374 = vmatprep.subr.mxu0 0.0
        %375 = vmatpush2.msra.mxu0 0.0
        %376 = vmatprep.subr.mxu0 0.0
        %377 = vmatpush2.msra.mxu0 0.0
        %378 = vmatprep.subr.mxu0 0.0
        %379 = vmatpush2.msra.mxu0 0.0
        %380 = vmatprep.subr.mxu0 0.0
        %381 = vmatpush2.msra.mxu0 0.0
        %382 = vmatprep.mubr.f32.mxu0 0.0
        %383 = vmatmul.mubr.f32.gmra.mxu0 %v218
        %v384 = vpop.f32.mrf.mxu0
        %v385 = vadd.f32 %v207, %v384
        %v386 = vpop.f32.mrf.mxu0
        %v387 = vadd.f32 %v211, %v386
        %388 = vmatprep.mubr.f32.mxu0 0.0
        %389 = vmatmul.mubr.f32.gmra.mxu0 %v221
        %v390 = vpop.f32.mrf.mxu0
        %v391 = vadd.f32 %v207, %v390
        %v392 = vpop.f32.mrf.mxu0
        %v393 = vadd.f32 %v211, %v392
        %394 = vmatprep.mubr.f32.mxu0 0.0
        %395 = vmatmul.mubr.f32.gmra.mxu0 %v224
        %v396 = vpop.f32.mrf.mxu0
        %v397 = vadd.f32 %v207, %v396
        %v398 = vpop.f32.mrf.mxu0
        %v399 = vadd.f32 %v211, %v398
        %400 = vmatprep.mubr.f32.mxu0 0.0
        %401 = vmatmul.mubr.f32.gmra.mxu0 %v227
        %v402 = vpop.f32.mrf.mxu0
        %v403 = vadd.f32 %v207, %v402
        %v404 = vpop.f32.mrf.mxu0
        %v405 = vadd.f32 %v211, %v404
        %406 = vmatprep.mubr.f32.mxu0 0.0
        %407 = vmatmul.mubr.f32.gmra.mxu0 %v230
        %v408 = vpop.f32.mrf.mxu0
        %v409 = vadd.f32 %v207, %v408
        %v410 = vpop.f32.mrf.mxu0
        %v411 = vadd.f32 %v211, %v410
        %412 = vmatprep.mubr.f32.mxu0 0.0
        %413 = vmatmul.mubr.f32.gmra.mxu0 %v233
        %v414 = vpop.f32.mrf.mxu0
        %v415 = vadd.f32 %v207, %v414
        %v416 = vpop.f32.mrf.mxu0
        %v417 = vadd.f32 %v211, %v416
        %418 = vmatprep.mubr.f32.mxu0 0.0
        %419 = vmatmul.mubr.f32.gmra.mxu0 %v236
        %v420 = vpop.f32.mrf.mxu0
        %v421 = vadd.f32 %v207, %v420
        %v422 = vpop.f32.mrf.mxu0
        %v423 = vadd.f32 %v211, %v422
        %424 = vmatprep.mubr.f32.mxu0 0.0
        %425 = vmatmul.mubr.f32.gmra.mxu0 %v239
        %v426 = vpop.f32.mrf.mxu0
        %v427 = vadd.f32 %v207, %v426
        %v428 = vpop.f32.mrf.mxu0
        %v429 = vadd.f32 %v211, %v428
        %430 = vmatprep.mubr.f32.mxu0 0.0
        %431 = vmatmul.mubr.f32.gmra.mxu0 %v242
        %v432 = vpop.f32.mrf.mxu0
        %v433 = vadd.f32 %v207, %v432
        %v434 = vpop.f32.mrf.mxu0
        %v435 = vadd.f32 %v211, %v434
        %436 = vmatprep.mubr.f32.mxu0 0.0
        %437 = vmatmul.mubr.f32.gmra.mxu0 %v245
        %v438 = vpop.f32.mrf.mxu0
        %v439 = vadd.f32 %v207, %v438
        %v440 = vpop.f32.mrf.mxu0
        %v441 = vadd.f32 %v211, %v440
        %442 = vmatprep.mubr.f32.mxu0 0.0
        %443 = vmatmul.mubr.f32.gmra.mxu0 %v248
        %v444 = vpop.f32.mrf.mxu0
        %v445 = vadd.f32 %v207, %v444
        %v446 = vpop.f32.mrf.mxu0
        %v447 = vadd.f32 %v211, %v446
        %448 = vmatprep.mubr.f32.mxu0 0.0
        %449 = vmatmul.mubr.f32.gmra.mxu0 %v251
        %v450 = vpop.f32.mrf.mxu0
        %v451 = vadd.f32 %v207, %v450
        %v452 = vpop.f32.mrf.mxu0
        %v453 = vadd.f32 %v211, %v452
        %454 = vmatprep.mubr.f32.mxu0 0.0
        %455 = vmatmul.mubr.f32.gmra.mxu0 %v254
        %v456 = vpop.f32.mrf.mxu0
        %v457 = vadd.f32 %v207, %v456
        %v458 = vpop.f32.mrf.mxu0
        %v459 = vadd.f32 %v211, %v458
        %460 = vmatprep.mubr.f32.mxu0 0.0
        %461 = vmatmul.mubr.f32.gmra.mxu0 %v257
        %v462 = vpop.f32.mrf.mxu0
        %v463 = vadd.f32 %v207, %v462
        %v464 = vpop.f32.mrf.mxu0
        %v465 = vadd.f32 %v211, %v464
        %466 = vmatprep.mubr.f32.mxu0 0.0
        %467 = vmatmul.mubr.f32.gmra.mxu0 %v260
        %v468 = vpop.f32.mrf.mxu0
        %v469 = vadd.f32 %v207, %v468
        %v470 = vpop.f32.mrf.mxu0
        %v471 = vadd.f32 %v211, %v470
        %472 = vmatprep.mubr.f32.mxu0 0.0
        %473 = vmatmul.mubr.f32.gmra.mxu0 %v263
        %v474 = vpop.f32.mrf.mxu0
        %v475 = vadd.f32 %v207, %v474
        %v476 = vpop.f32.mrf.mxu0
        %v477 = vadd.f32 %v211, %v476
        %478 = vmatprep.mubr.f32.mxu0 0.0
        %479 = vmatmul.mubr.f32.gmra.mxu0 %v266
        %v480 = vpop.f32.mrf.mxu0
        %v481 = vadd.f32 %v207, %v480
        %v482 = vpop.f32.mrf.mxu0
        %v483 = vadd.f32 %v211, %v482
        %484 = vmatprep.mubr.f32.mxu0 0.0
        %485 = vmatmul.mubr.f32.gmra.mxu0 %v269
        %v486 = vpop.f32.mrf.mxu0
        %v487 = vadd.f32 %v207, %v486
        %v488 = vpop.f32.mrf.mxu0
        %v489 = vadd.f32 %v211, %v488
        %490 = vmatprep.mubr.f32.mxu0 0.0
        %491 = vmatmul.mubr.f32.gmra.mxu0 %v272
        %v492 = vpop.f32.mrf.mxu0
        %v493 = vadd.f32 %v207, %v492
        %v494 = vpop.f32.mrf.mxu0
        %v495 = vadd.f32 %v211, %v494
        %496 = vmatprep.mubr.f32.mxu0 0.0
        %497 = vmatmul.mubr.f32.gmra.mxu0 %v275
        %v498 = vpop.f32.mrf.mxu0
        %v499 = vadd.f32 %v207, %v498
        %v500 = vpop.f32.mrf.mxu0
        %v501 = vadd.f32 %v211, %v500
        %502 = vmatprep.mubr.f32.mxu0 0.0
        %503 = vmatmul.mubr.f32.gmra.mxu0 %v278
        %v504 = vpop.f32.mrf.mxu0
        %v505 = vadd.f32 %v207, %v504
        %v506 = vpop.f32.mrf.mxu0
        %v507 = vadd.f32 %v211, %v506
        %508 = vmatprep.mubr.f32.mxu0 0.0
        %509 = vmatmul.mubr.f32.gmra.mxu0 %v281
        %v510 = vpop.f32.mrf.mxu0
        %v511 = vadd.f32 %v207, %v510
        %v512 = vpop.f32.mrf.mxu0
        %v513 = vadd.f32 %v211, %v512
        %514 = vmatprep.mubr.f32.mxu0 0.0
        %515 = vmatmul.mubr.f32.gmra.mxu0 %v284
        %v516 = vpop.f32.mrf.mxu0
        %v517 = vadd.f32 %v207, %v516
        %v518 = vpop.f32.mrf.mxu0
        %v519 = vadd.f32 %v211, %v518
        %520 = vmatprep.mubr.f32.mxu0 0.0
        %521 = vmatmul.mubr.f32.gmra.mxu0 %v287
        %v522 = vpop.f32.mrf.mxu0
        %v523 = vadd.f32 %v207, %v522
        %v524 = vpop.f32.mrf.mxu0
        %v525 = vadd.f32 %v211, %v524
        %526 = vmatprep.mubr.f32.mxu0 0.0
        %527 = vmatmul.mubr.f32.gmra.mxu0 %v290
        %v528 = vpop.f32.mrf.mxu0
        %v529 = vadd.f32 %v207, %v528
        %v530 = vpop.f32.mrf.mxu0
        %v531 = vadd.f32 %v211, %v530
        %532 = vmatprep.mubr.f32.mxu0 0.0
        %533 = vmatmul.mubr.f32.gmra.mxu0 %v293
        %v534 = vpop.f32.mrf.mxu0
        %v535 = vadd.f32 %v207, %v534
        %v536 = vpop.f32.mrf.mxu0
        %v537 = vadd.f32 %v211, %v536
        %538 = vmatprep.mubr.f32.mxu0 0.0
        %539 = vmatmul.mubr.f32.gmra.mxu0 %v296
        %v540 = vpop.f32.mrf.mxu0
        %v541 = vadd.f32 %v207, %v540
        %v542 = vpop.f32.mrf.mxu0
        %v543 = vadd.f32 %v211, %v542
        %544 = vmatprep.mubr.f32.mxu0 0.0
        %545 = vmatmul.mubr.f32.gmra.mxu0 %v299
        %v546 = vpop.f32.mrf.mxu0
        %v547 = vadd.f32 %v207, %v546
        %v548 = vpop.f32.mrf.mxu0
        %v549 = vadd.f32 %v211, %v548
        %550 = vmatprep.mubr.f32.mxu0 0.0
        %551 = vmatmul.mubr.f32.gmra.mxu0 %v302
        %v552 = vpop.f32.mrf.mxu0
        %v553 = vadd.f32 %v207, %v552
        %v554 = vpop.f32.mrf.mxu0
        %v555 = vadd.f32 %v211, %v554
        %556 = vmatprep.mubr.f32.mxu0 0.0
        %557 = vmatmul.mubr.f32.gmra.mxu0 %v305
        %v558 = vpop.f32.mrf.mxu0
        %v559 = vadd.f32 %v207, %v558
        %v560 = vpop.f32.mrf.mxu0
        %v561 = vadd.f32 %v211, %v560
        %562 = vmatprep.mubr.f32.mxu0 0.0
        %563 = vmatmul.mubr.f32.gmra.mxu0 %v308
        %v564 = vpop.f32.mrf.mxu0
        %v565 = vadd.f32 %v207, %v564
        %v566 = vpop.f32.mrf.mxu0
        %v567 = vadd.f32 %v211, %v566
        %568 = vmatprep.mubr.f32.mxu0 0.0
        %569 = vmatmul.mubr.f32.gmra.mxu0 %v311
        %v570 = vpop.f32.mrf.mxu0
        %v571 = vadd.f32 %v207, %v570
        %v572 = vpop.f32.mrf.mxu0
        %v573 = vadd.f32 %v211, %v572
        %574 = vdwg.mxu0
        %v575 = vmax.f32 %v385, 0.0
        %v576 = vmax.f32 %v387, 0.0
        %v577 = vmax.f32 %v391, 0.0
        %v578 = vmax.f32 %v393, 0.0
        %v579 = vmax.f32 %v397, 0.0
        %v580 = vmax.f32 %v399, 0.0
        %v581 = vmax.f32 %v403, 0.0
        %v582 = vmax.f32 %v405, 0.0
        %v583 = vmax.f32 %v409, 0.0
        %v584 = vmax.f32 %v411, 0.0
        %v585 = vmax.f32 %v415, 0.0
        %v586 = vmax.f32 %v417, 0.0
        %v587 = vmax.f32 %v421, 0.0
        %v588 = vmax.f32 %v423, 0.0
        %v589 = vmax.f32 %v427, 0.0
        %v590 = vmax.f32 %v429, 0.0
        %v591 = vmax.f32 %v433, 0.0
        %v592 = vmax.f32 %v435, 0.0
        %v593 = vmax.f32 %v439, 0.0
        %v594 = vmax.f32 %v441, 0.0
        %v595 = vmax.f32 %v445, 0.0
        %v596 = vmax.f32 %v447, 0.0
        %v597 = vmax.f32 %v451, 0.0
        %v598 = vmax.f32 %v453, 0.0
        %v599 = vmax.f32 %v457, 0.0
        %v600 = vmax.f32 %v459, 0.0
        %v601 = vmax.f32 %v463, 0.0
        %v602 = vmax.f32 %v465, 0.0
        %v603 = vmax.f32 %v469, 0.0
        %v604 = vmax.f32 %v471, 0.0
        %v605 = vmax.f32 %v475, 0.0
        %v606 = vmax.f32 %v477, 0.0
        %v607 = vmax.f32 %v481, 0.0
        %v608 = vmax.f32 %v483, 0.0
        %v609 = vmax.f32 %v487, 0.0
        %v610 = vmax.f32 %v489, 0.0
        %v611 = vmax.f32 %v493, 0.0
        %v612 = vmax.f32 %v495, 0.0
        %v613 = vmax.f32 %v499, 0.0
        %v614 = vmax.f32 %v501, 0.0
        %v615 = vmax.f32 %v505, 0.0
        %v616 = vmax.f32 %v507, 0.0
        %v617 = vmax.f32 %v511, 0.0
        %v618 = vmax.f32 %v513, 0.0
        %v619 = vmax.f32 %v517, 0.0
        %v620 = vmax.f32 %v519, 0.0
        %v621 = vmax.f32 %v523, 0.0
        %v622 = vmax.f32 %v525, 0.0
        %v623 = vmax.f32 %v529, 0.0
        %v624 = vmax.f32 %v531, 0.0
        %v625 = vmax.f32 %v535, 0.0
        %v626 = vmax.f32 %v537, 0.0
        %v627 = vmax.f32 %v541, 0.0
        %v628 = vmax.f32 %v543, 0.0
        %v629 = vmax.f32 %v547, 0.0
        %v630 = vmax.f32 %v549, 0.0
        %v631 = vmax.f32 %v553, 0.0
        %v632 = vmax.f32 %v555, 0.0
        %v633 = vmax.f32 %v559, 0.0
        %v634 = vmax.f32 %v561, 0.0
        %v635 = vmax.f32 %v565, 0.0
        %v636 = vmax.f32 %v567, 0.0
        %v637 = vmax.f32 %v571, 0.0
        %v638 = vmax.f32 %v573, 0.0
        %639 = vst [vmem:[%s163] sm:$0xff] %v575
        %640 = vst [vmem:[%s163 + $0x8] sm:$0xff] %v576
        %641 = vst [vmem:[%s163 + $0x10] sm:$0xff] %v577
        %642 = vst [vmem:[%s163 + $0x18] sm:$0xff] %v578
        %643 = vst [vmem:[%s163 + $0x20] sm:$0xff] %v579
        %644 = vst [vmem:[%s163 + $0x28] sm:$0xff] %v580
        %645 = vst [vmem:[%s163 + $0x30] sm:$0xff] %v581
        %646 = vst [vmem:[%s163 + $0x38] sm:$0xff] %v582
        %647 = vst [vmem:[%s163 + $0x40] sm:$0xff] %v583
        %648 = vst [vmem:[%s163 + $0x48] sm:$0xff] %v584
        %649 = vst [vmem:[%s163 + $0x50] sm:$0xff] %v585
        %650 = vst [vmem:[%s163 + $0x58] sm:$0xff] %v586
        %651 = vst [vmem:[%s163 + $0x60] sm:$0xff] %v587
        %652 = vst [vmem:[%s163 + $0x68] sm:$0xff] %v588
        %653 = vst [vmem:[%s163 + $0x70] sm:$0xff] %v589
        %654 = vst [vmem:[%s163 + $0x78] sm:$0xff] %v590
        %655 = vst [vmem:[%s163 + $0x80] sm:$0xff] %v591
        %656 = vst [vmem:[%s163 + $0x88] sm:$0xff] %v592
        %657 = vst [vmem:[%s163 + $0x90] sm:$0xff] %v593
        %658 = vst [vmem:[%s163 + $0x98] sm:$0xff] %v594
        %659 = vst [vmem:[%s163 + $0xa0] sm:$0xff] %v595
        %660 = vst [vmem:[%s163 + $0xa8] sm:$0xff] %v596
        %661 = vst [vmem:[%s163 + $0xb0] sm:$0xff] %v597
        %662 = vst [vmem:[%s163 + $0xb8] sm:$0xff] %v598
        %663 = vst [vmem:[%s163 + $0xc0] sm:$0xff] %v599
        %664 = vst [vmem:[%s163 + $0xc8] sm:$0xff] %v600
        %665 = vst [vmem:[%s163 + $0xd0] sm:$0xff] %v601
        %666 = vst [vmem:[%s163 + $0xd8] sm:$0xff] %v602
        %667 = vst [vmem:[%s163 + $0xe0] sm:$0xff] %v603
        %668 = vst [vmem:[%s163 + $0xe8] sm:$0xff] %v604
        %669 = vst [vmem:[%s163 + $0xf0] sm:$0xff] %v605
        %670 = vst [vmem:[%s163 + $0xf8] sm:$0xff] %v606
        %671 = vst [vmem:[%s163 + $0x100] sm:$0xff] %v607
        %672 = vst [vmem:[%s163 + $0x108] sm:$0xff] %v608
        %673 = vst [vmem:[%s163 + $0x110] sm:$0xff] %v609
        %674 = vst [vmem:[%s163 + $0x118] sm:$0xff] %v610
        %675 = vst [vmem:[%s163 + $0x120] sm:$0xff] %v611
        %676 = vst [vmem:[%s163 + $0x128] sm:$0xff] %v612
        %677 = vst [vmem:[%s163 + $0x130] sm:$0xff] %v613
        %678 = vst [vmem:[%s163 + $0x138] sm:$0xff] %v614
        %679 = vst [vmem:[%s163 + $0x140] sm:$0xff] %v615
        %680 = vst [vmem:[%s163 + $0x148] sm:$0xff] %v616
        %681 = vst [vmem:[%s163 + $0x150] sm:$0xff] %v617
        %682 = vst [vmem:[%s163 + $0x158] sm:$0xff] %v618
        %683 = vst [vmem:[%s163 + $0x160] sm:$0xff] %v619
        %684 = vst [vmem:[%s163 + $0x168] sm:$0xff] %v620
        %685 = vst [vmem:[%s163 + $0x170] sm:$0xff] %v621
        %686 = vst [vmem:[%s163 + $0x178] sm:$0xff] %v622
        %687 = vst [vmem:[%s163 + $0x180] sm:$0xff] %v623
        %688 = vst [vmem:[%s163 + $0x188] sm:$0xff] %v624
        %689 = vst [vmem:[%s163 + $0x190] sm:$0xff] %v625
        %690 = vst [vmem:[%s163 + $0x198] sm:$0xff] %v626
        %691 = vst [vmem:[%s163 + $0x1a0] sm:$0xff] %v627
        %692 = vst [vmem:[%s163 + $0x1a8] sm:$0xff] %v628
        %693 = vst [vmem:[%s163 + $0x1b0] sm:$0xff] %v629
        %694 = vst [vmem:[%s163 + $0x1b8] sm:$0xff] %v630
        %695 = vst [vmem:[%s163 + $0x1c0] sm:$0xff] %v631
        %696 = vst [vmem:[%s163 + $0x1c8] sm:$0xff] %v632
        %697 = vst [vmem:[%s163 + $0x1d0] sm:$0xff] %v633
        %698 = vst [vmem:[%s163 + $0x1d8] sm:$0xff] %v634
        %699 = vst [vmem:[%s163 + $0x1e0] sm:$0xff] %v635
        %700 = vst [vmem:[%s163 + $0x1e8] sm:$0xff] %v636
        %701 = vst [vmem:[%s163 + $0x1f0] sm:$0xff] %v637
        %702 = vst [vmem:[%s163 + $0x1f8] sm:$0xff] %v638
        %s703 = sand.u32 %s93, 1
        %s704 = scalar_lea.sflag [#allocation3], %s703
        %s705 = sand.u32 %s93, 1
        %s706 = smul.addr %s705, 512
        %s707 = scalar_lea.vmem [#allocation2], %s706
        // Predicated region
        $region33: #{tpu_custom_call.1} parent=31 // pred_check
          %p708 = pneg %p103
        $region34: #{tpu_custom_call.1} parent=31 // pred_check_branch
          %710 = sbr.rel (%p708) target = $region36
        $region35: #{tpu_custom_call.1} parent=31 // pred_region
          %s712 = ssub.s32 8192, 8192
          %713 = vsyncadd %s704, %s712
          %s714 = smul.addr %s17, 64
          %s715 = smul.addr %s714, 128
          %s716 = scalar_lea.hbm %s3, %s715
          %s717 = sshll.u32 %s707, 4
          %s718 = int_to_ptr.vmem [resolvable:$true] %s717
          %723 = dma.vmem_to_hbm [thread:$0]  %s718, 8192, %s716, %s704, 256, 256, 16
        $region36: #{tpu_custom_call.1} parent=31 // pred_fallthru
          _
      $region32: #{tpu_custom_call.1} parent=5 // pred_fallthru
        _
      %p724 = scmp.le.s32.totalorder 2, %s12
      // Predicated region
      $region37: #{tpu_custom_call.1} parent=5 // pred_check
        %p725 = pneg %p724
      $region38: #{tpu_custom_call.1} parent=5 // pred_check_branch
        %727 = sbr.rel (%p725) target = $region40
      $region39: #{tpu_custom_call.1} parent=5 // pred_region
        %s728 = ssub.s32 %s12, 2
        // Predicated region
        $region41: #{tpu_custom_call.1} parent=39 // pred_check
          %p729 = pneg %p109
        $region42: #{tpu_custom_call.1} parent=39 // pred_check_branch
          %731 = sbr.rel (%p729) target = $region44
        $region43: #{tpu_custom_call.1} parent=39 // pred_region
          %s732 = sand.u32 %s94, 1
          %s733 = scalar_lea.sflag [#allocation3], %s732
          %s734 = sand.u32 %s94, 1
          %s735 = smul.addr %s734, 512
          %s736 = scalar_lea.vmem [#allocation2], %s735
          %737 = dma.done %s733, 8192
        $region44: #{tpu_custom_call.1} parent=39 // pred_fallthru
          _
      $region40: #{tpu_custom_call.1} parent=5 // pred_fallthru
        _
    $region6: #{tpu_custom_call.1} parent=1 // loop_footer
      %s16 = sadd.s32 1, %s12
    $region7: #{tpu_custom_call.1} parent=1 // loop_footer_branch
      %11 = sbr.rel target = $region3
    $region8: #{tpu_custom_call.1} parent=1 // loop_exit
      _
    %738 = vsyncpa [#allocation3], 1
    %s739 = scalar_lea.sflag [#allocation3], 1
    %740 = vsyncpa %s739, 1

</llo_original>
